<compile_context>
chip_gen: v5e
topology: v5e:2x2
jax: 0.10.0
libtpu: 0.0.40
codegen_flags: <defaults>
</compile_context>

<pallas_src>
import jax
import jax.numpy as jnp
from jax.experimental import pallas as pl
from jax.experimental.pallas import tpu as pltpu  # noqa: F401  (used on the scaling path)

HIDDEN = 32  # stands in for config.hidden_size


# ----------------------------------------------------------------------------
# Fused kernel: LSTM recurrence (PyTorch gate order i, f, g, o) + dueling head.
# ----------------------------------------------------------------------------
def r2d2_fused_kernel(x_ref, h0_ref, c0_ref, wx_ref, wh_ref, b_ref,
                      beta_ref, w_head_ref, wb_head_ref, b_head_ref,
                      q_ref, hT_ref, cT_ref):
    TB, _ = x_ref.shape          # T*Bp rows, time-major (row t*Bp + b), Bp sublane-padded
    Bp, H = h0_ref.shape
    T = TB // Bp
    A = q_ref.shape[1]

    # --- Input projection hoisted out of the recurrence (bias folded in) ------
    # (T*Bp, D) @ (D, 4H) -> (T*Bp, 4H); 4H = 128 lanes, one clean MXU op.
    xproj = (jnp.dot(x_ref[...], wx_ref[...], preferred_element_type=jnp.float32)
             + b_ref[...])

    h = h0_ref[...]              # (Bp, H) float32 state, full sublane tile
    c = c0_ref[...]
    hs = []

    # --- Serial recurrence: one lane-exact (Bp,H)x(H,4H) matmul per step ------
    # T is small and static -> fully unrolled at trace time.
    for t in range(T):
        gates = xproj[t * Bp:(t + 1) * Bp, :] + jnp.dot(
            h, wh_ref[...], preferred_element_type=jnp.float32)      # (Bp, 4H)
        # 2 EUP pushes on the full 128-lane vreg, then 32-lane slices.
        sg = jax.nn.sigmoid(gates)
        th = jnp.tanh(gates)
        i = sg[:, 0 * H:1 * H]
        f = sg[:, 1 * H:2 * H]
        g = th[:, 2 * H:3 * H]
        o = sg[:, 3 * H:4 * H]
        c = f * c + i * g
        h = o * jnp.tanh(c)
        hs.append(h)             # values stay in vregs; no scratch round trip

    # Final states written exactly once (aliased onto the h0/c0 input buffers).
    hT_ref[...] = h
    cT_ref[...] = c

    # --- Dueling head fused in, single packed matmul ---------------------------
    feat = jnp.concatenate(hs, axis=0)            # (T*Bp, H), sublane-exact pieces
    beta = beta_ref[...]                          # (T*Bp, 1)
    # head columns: [adv_0 .. adv_{A-1} | val]
    head = (jnp.dot(feat, w_head_ref[...], preferred_element_type=jnp.float32)
            + beta * wb_head_ref[...] + b_head_ref[...])              # (T*Bp, A+1)
    adv = head[:, :A]
    val = head[:, A:A + 1]
    q_ref[...] = val + adv - jnp.mean(adv, axis=-1, keepdims=True)


# ----------------------------------------------------------------------------
# Wrapper replicating R2D2.forward(x, hidden, beta)
# ----------------------------------------------------------------------------
def r2d2_forward(x, hidden, beta, params):
    h0, c0 = hidden                                   # each (1, B, H)
    B, T, D = x.shape
    H = h0.shape[-1]
    A = params["w_head"].shape[1] - 1
    Bp = max(8, -(-B // 8) * 8)                       # sublane-pad the batch

    # Tiny relayouts: time-major row blocks, batch padded to Bp rows.
    x_tm = jnp.pad(jnp.transpose(x, (1, 0, 2)).astype(jnp.float32),
                   ((0, 0), (0, Bp - B), (0, 0)))                    # (T, Bp, D)
    x_flat = x_tm.reshape(T * Bp, D)
    beta_tm = jnp.pad(jnp.transpose(jnp.asarray(beta, jnp.float32)),
                      ((0, 0), (0, Bp - B)))                         # (T, Bp)
    beta_flat = beta_tm.reshape(T * Bp, 1)
    h0p = jnp.pad(h0[0].astype(jnp.float32), ((0, Bp - B), (0, 0)))  # (Bp, H)
    c0p = jnp.pad(c0[0].astype(jnp.float32), ((0, Bp - B), (0, 0)))

    q_flat, hTp, cTp = pl.pallas_call(
        r2d2_fused_kernel,
        out_shape=(jax.ShapeDtypeStruct((T * Bp, A), jnp.float32),
                   jax.ShapeDtypeStruct((Bp, H), jnp.float32),
                   jax.ShapeDtypeStruct((Bp, H), jnp.float32)),
        # h0 -> hT and c0 -> cT reuse the same buffers (state written once).
        input_output_aliases={1: 1, 2: 2},
    )(x_flat, h0p, c0p,
      params["wx"], params["wh"], params["b"],
      beta_flat,
      params["w_head"], params["wb_head"], params["b_head"])

    q = jnp.transpose(q_flat.reshape(T, Bp, A)[:, :B], (1, 0, 2))    # batch_first
    return q, (hTp[:B][None], cTp[:B][None])


# ----------------------------------------------------------------------------
# Pure-JAX reference for correctness check
# ----------------------------------------------------------------------------
def r2d2_reference(x, hidden, beta, raw):
    W_ih, W_hh, b_ih, b_hh = raw["W_ih"], raw["W_hh"], raw["b_ih"], raw["b_hh"]
    W_adv, b_adv, W_val, b_val = raw["W_adv"], raw["b_adv"], raw["W_val"], raw["b_val"]
    h, c = hidden[0][0], hidden[1][0]
    H = h.shape[-1]
    hi = jax.lax.Precision.HIGHEST
    outs = []
    for t in range(x.shape[1]):
        g = (jnp.dot(x[:, t], W_ih.T, precision=hi)
             + jnp.dot(h, W_hh.T, precision=hi) + b_ih + b_hh)
        i = jax.nn.sigmoid(g[:, 0 * H:1 * H])
        f = jax.nn.sigmoid(g[:, 1 * H:2 * H])
        gg = jnp.tanh(g[:, 2 * H:3 * H])
        o = jax.nn.sigmoid(g[:, 3 * H:4 * H])
        c = f * c + i * gg
        h = o * jnp.tanh(c)
        outs.append(h)
    out = jnp.stack(outs, axis=1)                                    # (B, T, H)
    cat = jnp.concatenate([out, jnp.asarray(beta, jnp.float32)[..., None]], axis=2)
    adv = jnp.dot(cat, W_adv.T, precision=hi) + b_adv
    val = jnp.dot(cat, W_val.T, precision=hi) + b_val
    q = val + (adv - adv.mean(axis=-1, keepdims=True))
    return q, (h[None], c[None])


if __name__ == "__main__":
    B, T, D, A, H = 2, 8, 4, 4, HIDDEN          # num_inputs=4, num_outputs=4
    key = jax.random.PRNGKey(0)
    ks = jax.random.split(key, 12)
    bound = 1.0 / jnp.sqrt(H)

    # Deterministic synthetic parameters (PyTorch-shaped)
    W_ih = jax.random.uniform(ks[0], (4 * H, D), jnp.float32, -bound, bound)
    W_hh = jax.random.uniform(ks[1], (4 * H, H), jnp.float32, -bound, bound)
    b_ih = jax.random.uniform(ks[2], (4 * H,), jnp.float32, -bound, bound)
    b_hh = jax.random.uniform(ks[3], (4 * H,), jnp.float32, -bound, bound)
    W_adv = jax.random.uniform(ks[4], (A, H + 1), jnp.float32, -bound, bound)
    b_adv = jax.random.uniform(ks[5], (A,), jnp.float32, -bound, bound)
    W_val = jax.random.uniform(ks[6], (1, H + 1), jnp.float32, -bound, bound)
    b_val = jax.random.uniform(ks[7], (1,), jnp.float32, -bound, bound)

    # Kernel-friendly parameter layout:
    #  * gates fused along the lane dim (4H = 128), columns [i|f|g|o]
    #  * dueling head packed into ONE matmul, columns [adv_0..adv_{A-1} | val]
    params = {
        "wx": W_ih.T,                                              # (D, 4H)
        "wh": W_hh.T,                                              # (H, 4H)
        "b": (b_ih + b_hh)[None, :],                               # (1, 4H) combined bias
        "w_head": jnp.concatenate([W_adv[:, :H].T, W_val[:, :H].T], axis=1),       # (H, A+1)
        "wb_head": jnp.concatenate([W_adv[:, H][None, :], W_val[:, H][None, :]],
                                   axis=1),                                        # (1, A+1)
        "b_head": jnp.concatenate([b_adv[None, :], b_val[None, :]], axis=1),       # (1, A+1)
    }
    raw = dict(W_ih=W_ih, W_hh=W_hh, b_ih=b_ih, b_hh=b_hh,
               W_adv=W_adv, b_adv=b_adv, W_val=W_val, b_val=b_val)

    # Inputs
    x = jax.random.normal(ks[8], (B, T, D), jnp.float32)
    h0 = jax.random.normal(ks[9], (1, B, H), jnp.float32)
    c0 = jax.random.normal(ks[10], (1, B, H), jnp.float32)
    beta = jax.random.uniform(ks[11], (B, T), jnp.float32)

    q, (hT, cT) = r2d2_forward(x, (h0, c0), beta, params)
    q = jax.block_until_ready(q)
    hT = jax.block_until_ready(hT)
    cT = jax.block_until_ready(cT)

    q_ref, (h_ref, c_ref) = r2d2_reference(x, (h0, c0), beta, raw)
    assert q.shape == (B, T, A) and hT.shape == (1, B, H) and cT.shape == (1, B, H)
    assert jnp.allclose(q, q_ref, atol=1e-3, rtol=1e-3), "qvalue mismatch"
    assert jnp.allclose(hT, h_ref, atol=1e-3, rtol=1e-3), "h mismatch"
    assert jnp.allclose(cT, c_ref, atol=1e-3, rtol=1e-3), "c mismatch"

    print("KERNEL_OK")
</pallas_src>

<mosaic_0001>
module attributes {stable_mosaic.version = 11 : i64} {
  func.func @r2d2_fused_kernel(%arg0: memref<64x4xf32, #tpu.memory_space<vmem>>, %arg1: memref<8x32xf32, #tpu.memory_space<vmem>>, %arg2: memref<8x32xf32, #tpu.memory_space<vmem>>, %arg3: memref<4x128xf32, #tpu.memory_space<vmem>>, %arg4: memref<32x128xf32, #tpu.memory_space<vmem>>, %arg5: memref<1x128xf32, #tpu.memory_space<vmem>>, %arg6: memref<64x1xf32, #tpu.memory_space<vmem>>, %arg7: memref<32x5xf32, #tpu.memory_space<vmem>>, %arg8: memref<1x5xf32, #tpu.memory_space<vmem>>, %arg9: memref<1x5xf32, #tpu.memory_space<vmem>>, %arg10: memref<64x4xf32, #tpu.memory_space<vmem>>, %arg11: memref<8x32xf32, #tpu.memory_space<vmem>>, %arg12: memref<8x32xf32, #tpu.memory_space<vmem>>) attributes {dimension_semantics = [], scalar_prefetch = 0 : i64, scratch_operands = 0 : i64, tpu.core_type = #tpu.core_type<tc>} {
    %c0 = arith.constant 0 : index
    %c0_0 = arith.constant 0 : index
    %0 = vector.load %arg0[%c0, %c0_0] : memref<64x4xf32, #tpu.memory_space<vmem>>, vector<64x4xf32>
    %c0_1 = arith.constant 0 : index
    %c0_2 = arith.constant 0 : index
    %1 = vector.load %arg3[%c0_1, %c0_2] : memref<4x128xf32, #tpu.memory_space<vmem>>, vector<4x128xf32>
    %cst = arith.constant dense<0.000000e+00> : vector<64x128xf32>
    %2 = tpu.matmul %0, %1, %cst {dimension_numbers = #tpu.dot_dimension_numbers<[1], [0], [0], [1], [0, 0, 1, 1], [], []>} : vector<64x4xf32>, vector<4x128xf32>, vector<64x128xf32> -> vector<64x128xf32>
    %c0_3 = arith.constant 0 : index
    %c0_4 = arith.constant 0 : index
    %3 = vector.load %arg5[%c0_3, %c0_4] : memref<1x128xf32, #tpu.memory_space<vmem>>, vector<1x128xf32>
    %4 = vector.broadcast %3 : vector<1x128xf32> to vector<64x128xf32>
    %5 = arith.addf %2, %4 : vector<64x128xf32>
    %c0_5 = arith.constant 0 : index
    %c0_6 = arith.constant 0 : index
    %6 = vector.load %arg1[%c0_5, %c0_6] : memref<8x32xf32, #tpu.memory_space<vmem>>, vector<8x32xf32>
    %c0_7 = arith.constant 0 : index
    %c0_8 = arith.constant 0 : index
    %7 = vector.load %arg2[%c0_7, %c0_8] : memref<8x32xf32, #tpu.memory_space<vmem>>, vector<8x32xf32>
    %8 = vector.extract_strided_slice %5 {offsets = [0, 0], sizes = [8, 128], strides = [1, 1]} : vector<64x128xf32> to vector<8x128xf32>
    %c0_9 = arith.constant 0 : index
    %c0_10 = arith.constant 0 : index
    %9 = vector.load %arg4[%c0_9, %c0_10] : memref<32x128xf32, #tpu.memory_space<vmem>>, vector<32x128xf32>
    %cst_11 = arith.constant dense<0.000000e+00> : vector<8x128xf32>
    %10 = tpu.matmul %6, %9, %cst_11 {dimension_numbers = #tpu.dot_dimension_numbers<[1], [0], [0], [1], [0, 0, 1, 1], [], []>} : vector<8x32xf32>, vector<32x128xf32>, vector<8x128xf32> -> vector<8x128xf32>
    %11 = arith.addf %8, %10 : vector<8x128xf32>
    %12 = arith.negf %11 : vector<8x128xf32>
    %13 = math.exp %12 : vector<8x128xf32>
    %cst_12 = arith.constant 1.000000e+00 : f32
    %14 = vector.broadcast %cst_12 : f32 to vector<8x128xf32>
    %15 = arith.addf %14, %13 : vector<8x128xf32>
    %16 = arith.divf %14, %15 : vector<8x128xf32>
    %17 = math.tanh %11 : vector<8x128xf32>
    %18 = vector.extract_strided_slice %16 {offsets = [0, 0], sizes = [8, 32], strides = [1, 1]} : vector<8x128xf32> to vector<8x32xf32>
    %19 = vector.extract_strided_slice %16 {offsets = [0, 32], sizes = [8, 32], strides = [1, 1]} : vector<8x128xf32> to vector<8x32xf32>
    %20 = vector.extract_strided_slice %17 {offsets = [0, 64], sizes = [8, 32], strides = [1, 1]} : vector<8x128xf32> to vector<8x32xf32>
    %21 = vector.extract_strided_slice %16 {offsets = [0, 96], sizes = [8, 32], strides = [1, 1]} : vector<8x128xf32> to vector<8x32xf32>
    %22 = arith.mulf %19, %7 : vector<8x32xf32>
    %23 = arith.mulf %18, %20 : vector<8x32xf32>
    %24 = arith.addf %22, %23 : vector<8x32xf32>
    %25 = math.tanh %24 : vector<8x32xf32>
    %26 = arith.mulf %21, %25 : vector<8x32xf32>
    %27 = vector.extract_strided_slice %5 {offsets = [8, 0], sizes = [8, 128], strides = [1, 1]} : vector<64x128xf32> to vector<8x128xf32>
    %c0_13 = arith.constant 0 : index
    %c0_14 = arith.constant 0 : index
    %28 = vector.load %arg4[%c0_13, %c0_14] : memref<32x128xf32, #tpu.memory_space<vmem>>, vector<32x128xf32>
    %cst_15 = arith.constant dense<0.000000e+00> : vector<8x128xf32>
    %29 = tpu.matmul %26, %28, %cst_15 {dimension_numbers = #tpu.dot_dimension_numbers<[1], [0], [0], [1], [0, 0, 1, 1], [], []>} : vector<8x32xf32>, vector<32x128xf32>, vector<8x128xf32> -> vector<8x128xf32>
    %30 = arith.addf %27, %29 : vector<8x128xf32>
    %31 = arith.negf %30 : vector<8x128xf32>
    %32 = math.exp %31 : vector<8x128xf32>
    %cst_16 = arith.constant 1.000000e+00 : f32
    %33 = vector.broadcast %cst_16 : f32 to vector<8x128xf32>
    %34 = arith.addf %33, %32 : vector<8x128xf32>
    %35 = arith.divf %33, %34 : vector<8x128xf32>
    %36 = math.tanh %30 : vector<8x128xf32>
    %37 = vector.extract_strided_slice %35 {offsets = [0, 0], sizes = [8, 32], strides = [1, 1]} : vector<8x128xf32> to vector<8x32xf32>
    %38 = vector.extract_strided_slice %35 {offsets = [0, 32], sizes = [8, 32], strides = [1, 1]} : vector<8x128xf32> to vector<8x32xf32>
    %39 = vector.extract_strided_slice %36 {offsets = [0, 64], sizes = [8, 32], strides = [1, 1]} : vector<8x128xf32> to vector<8x32xf32>
    %40 = vector.extract_strided_slice %35 {offsets = [0, 96], sizes = [8, 32], strides = [1, 1]} : vector<8x128xf32> to vector<8x32xf32>
    %41 = arith.mulf %38, %24 : vector<8x32xf32>
    %42 = arith.mulf %37, %39 : vector<8x32xf32>
    %43 = arith.addf %41, %42 : vector<8x32xf32>
    %44 = math.tanh %43 : vector<8x32xf32>
    %45 = arith.mulf %40, %44 : vector<8x32xf32>
    %46 = vector.extract_strided_slice %5 {offsets = [16, 0], sizes = [8, 128], strides = [1, 1]} : vector<64x128xf32> to vector<8x128xf32>
    %c0_17 = arith.constant 0 : index
    %c0_18 = arith.constant 0 : index
    %47 = vector.load %arg4[%c0_17, %c0_18] : memref<32x128xf32, #tpu.memory_space<vmem>>, vector<32x128xf32>
    %cst_19 = arith.constant dense<0.000000e+00> : vector<8x128xf32>
    %48 = tpu.matmul %45, %47, %cst_19 {dimension_numbers = #tpu.dot_dimension_numbers<[1], [0], [0], [1], [0, 0, 1, 1], [], []>} : vector<8x32xf32>, vector<32x128xf32>, vector<8x128xf32> -> vector<8x128xf32>
    %49 = arith.addf %46, %48 : vector<8x128xf32>
    %50 = arith.negf %49 : vector<8x128xf32>
    %51 = math.exp %50 : vector<8x128xf32>
    %cst_20 = arith.constant 1.000000e+00 : f32
    %52 = vector.broadcast %cst_20 : f32 to vector<8x128xf32>
    %53 = arith.addf %52, %51 : vector<8x128xf32>
    %54 = arith.divf %52, %53 : vector<8x128xf32>
    %55 = math.tanh %49 : vector<8x128xf32>
    %56 = vector.extract_strided_slice %54 {offsets = [0, 0], sizes = [8, 32], strides = [1, 1]} : vector<8x128xf32> to vector<8x32xf32>
    %57 = vector.extract_strided_slice %54 {offsets = [0, 32], sizes = [8, 32], strides = [1, 1]} : vector<8x128xf32> to vector<8x32xf32>
    %58 = vector.extract_strided_slice %55 {offsets = [0, 64], sizes = [8, 32], strides = [1, 1]} : vector<8x128xf32> to vector<8x32xf32>
    %59 = vector.extract_strided_slice %54 {offsets = [0, 96], sizes = [8, 32], strides = [1, 1]} : vector<8x128xf32> to vector<8x32xf32>
    %60 = arith.mulf %57, %43 : vector<8x32xf32>
    %61 = arith.mulf %56, %58 : vector<8x32xf32>
    %62 = arith.addf %60, %61 : vector<8x32xf32>
    %63 = math.tanh %62 : vector<8x32xf32>
    %64 = arith.mulf %59, %63 : vector<8x32xf32>
    %65 = vector.extract_strided_slice %5 {offsets = [24, 0], sizes = [8, 128], strides = [1, 1]} : vector<64x128xf32> to vector<8x128xf32>
    %c0_21 = arith.constant 0 : index
    %c0_22 = arith.constant 0 : index
    %66 = vector.load %arg4[%c0_21, %c0_22] : memref<32x128xf32, #tpu.memory_space<vmem>>, vector<32x128xf32>
    %cst_23 = arith.constant dense<0.000000e+00> : vector<8x128xf32>
    %67 = tpu.matmul %64, %66, %cst_23 {dimension_numbers = #tpu.dot_dimension_numbers<[1], [0], [0], [1], [0, 0, 1, 1], [], []>} : vector<8x32xf32>, vector<32x128xf32>, vector<8x128xf32> -> vector<8x128xf32>
    %68 = arith.addf %65, %67 : vector<8x128xf32>
    %69 = arith.negf %68 : vector<8x128xf32>
    %70 = math.exp %69 : vector<8x128xf32>
    %cst_24 = arith.constant 1.000000e+00 : f32
    %71 = vector.broadcast %cst_24 : f32 to vector<8x128xf32>
    %72 = arith.addf %71, %70 : vector<8x128xf32>
    %73 = arith.divf %71, %72 : vector<8x128xf32>
    %74 = math.tanh %68 : vector<8x128xf32>
    %75 = vector.extract_strided_slice %73 {offsets = [0, 0], sizes = [8, 32], strides = [1, 1]} : vector<8x128xf32> to vector<8x32xf32>
    %76 = vector.extract_strided_slice %73 {offsets = [0, 32], sizes = [8, 32], strides = [1, 1]} : vector<8x128xf32> to vector<8x32xf32>
    %77 = vector.extract_strided_slice %74 {offsets = [0, 64], sizes = [8, 32], strides = [1, 1]} : vector<8x128xf32> to vector<8x32xf32>
    %78 = vector.extract_strided_slice %73 {offsets = [0, 96], sizes = [8, 32], strides = [1, 1]} : vector<8x128xf32> to vector<8x32xf32>
    %79 = arith.mulf %76, %62 : vector<8x32xf32>
    %80 = arith.mulf %75, %77 : vector<8x32xf32>
    %81 = arith.addf %79, %80 : vector<8x32xf32>
    %82 = math.tanh %81 : vector<8x32xf32>
    %83 = arith.mulf %78, %82 : vector<8x32xf32>
    %84 = vector.extract_strided_slice %5 {offsets = [32, 0], sizes = [8, 128], strides = [1, 1]} : vector<64x128xf32> to vector<8x128xf32>
    %c0_25 = arith.constant 0 : index
    %c0_26 = arith.constant 0 : index
    %85 = vector.load %arg4[%c0_25, %c0_26] : memref<32x128xf32, #tpu.memory_space<vmem>>, vector<32x128xf32>
    %cst_27 = arith.constant dense<0.000000e+00> : vector<8x128xf32>
    %86 = tpu.matmul %83, %85, %cst_27 {dimension_numbers = #tpu.dot_dimension_numbers<[1], [0], [0], [1], [0, 0, 1, 1], [], []>} : vector<8x32xf32>, vector<32x128xf32>, vector<8x128xf32> -> vector<8x128xf32>
    %87 = arith.addf %84, %86 : vector<8x128xf32>
    %88 = arith.negf %87 : vector<8x128xf32>
    %89 = math.exp %88 : vector<8x128xf32>
    %cst_28 = arith.constant 1.000000e+00 : f32
    %90 = vector.broadcast %cst_28 : f32 to vector<8x128xf32>
    %91 = arith.addf %90, %89 : vector<8x128xf32>
    %92 = arith.divf %90, %91 : vector<8x128xf32>
    %93 = math.tanh %87 : vector<8x128xf32>
    %94 = vector.extract_strided_slice %92 {offsets = [0, 0], sizes = [8, 32], strides = [1, 1]} : vector<8x128xf32> to vector<8x32xf32>
    %95 = vector.extract_strided_slice %92 {offsets = [0, 32], sizes = [8, 32], strides = [1, 1]} : vector<8x128xf32> to vector<8x32xf32>
    %96 = vector.extract_strided_slice %93 {offsets = [0, 64], sizes = [8, 32], strides = [1, 1]} : vector<8x128xf32> to vector<8x32xf32>
    %97 = vector.extract_strided_slice %92 {offsets = [0, 96], sizes = [8, 32], strides = [1, 1]} : vector<8x128xf32> to vector<8x32xf32>
    %98 = arith.mulf %95, %81 : vector<8x32xf32>
    %99 = arith.mulf %94, %96 : vector<8x32xf32>
    %100 = arith.addf %98, %99 : vector<8x32xf32>
    %101 = math.tanh %100 : vector<8x32xf32>
    %102 = arith.mulf %97, %101 : vector<8x32xf32>
    %103 = vector.extract_strided_slice %5 {offsets = [40, 0], sizes = [8, 128], strides = [1, 1]} : vector<64x128xf32> to vector<8x128xf32>
    %c0_29 = arith.constant 0 : index
    %c0_30 = arith.constant 0 : index
    %104 = vector.load %arg4[%c0_29, %c0_30] : memref<32x128xf32, #tpu.memory_space<vmem>>, vector<32x128xf32>
    %cst_31 = arith.constant dense<0.000000e+00> : vector<8x128xf32>
    %105 = tpu.matmul %102, %104, %cst_31 {dimension_numbers = #tpu.dot_dimension_numbers<[1], [0], [0], [1], [0, 0, 1, 1], [], []>} : vector<8x32xf32>, vector<32x128xf32>, vector<8x128xf32> -> vector<8x128xf32>
    %106 = arith.addf %103, %105 : vector<8x128xf32>
    %107 = arith.negf %106 : vector<8x128xf32>
    %108 = math.exp %107 : vector<8x128xf32>
    %cst_32 = arith.constant 1.000000e+00 : f32
    %109 = vector.broadcast %cst_32 : f32 to vector<8x128xf32>
    %110 = arith.addf %109, %108 : vector<8x128xf32>
    %111 = arith.divf %109, %110 : vector<8x128xf32>
    %112 = math.tanh %106 : vector<8x128xf32>
    %113 = vector.extract_strided_slice %111 {offsets = [0, 0], sizes = [8, 32], strides = [1, 1]} : vector<8x128xf32> to vector<8x32xf32>
    %114 = vector.extract_strided_slice %111 {offsets = [0, 32], sizes = [8, 32], strides = [1, 1]} : vector<8x128xf32> to vector<8x32xf32>
    %115 = vector.extract_strided_slice %112 {offsets = [0, 64], sizes = [8, 32], strides = [1, 1]} : vector<8x128xf32> to vector<8x32xf32>
    %116 = vector.extract_strided_slice %111 {offsets = [0, 96], sizes = [8, 32], strides = [1, 1]} : vector<8x128xf32> to vector<8x32xf32>
    %117 = arith.mulf %114, %100 : vector<8x32xf32>
    %118 = arith.mulf %113, %115 : vector<8x32xf32>
    %119 = arith.addf %117, %118 : vector<8x32xf32>
    %120 = math.tanh %119 : vector<8x32xf32>
    %121 = arith.mulf %116, %120 : vector<8x32xf32>
    %122 = vector.extract_strided_slice %5 {offsets = [48, 0], sizes = [8, 128], strides = [1, 1]} : vector<64x128xf32> to vector<8x128xf32>
    %c0_33 = arith.constant 0 : index
    %c0_34 = arith.constant 0 : index
    %123 = vector.load %arg4[%c0_33, %c0_34] : memref<32x128xf32, #tpu.memory_space<vmem>>, vector<32x128xf32>
    %cst_35 = arith.constant dense<0.000000e+00> : vector<8x128xf32>
    %124 = tpu.matmul %121, %123, %cst_35 {dimension_numbers = #tpu.dot_dimension_numbers<[1], [0], [0], [1], [0, 0, 1, 1], [], []>} : vector<8x32xf32>, vector<32x128xf32>, vector<8x128xf32> -> vector<8x128xf32>
    %125 = arith.addf %122, %124 : vector<8x128xf32>
    %126 = arith.negf %125 : vector<8x128xf32>
    %127 = math.exp %126 : vector<8x128xf32>
    %cst_36 = arith.constant 1.000000e+00 : f32
    %128 = vector.broadcast %cst_36 : f32 to vector<8x128xf32>
    %129 = arith.addf %128, %127 : vector<8x128xf32>
    %130 = arith.divf %128, %129 : vector<8x128xf32>
    %131 = math.tanh %125 : vector<8x128xf32>
    %132 = vector.extract_strided_slice %130 {offsets = [0, 0], sizes = [8, 32], strides = [1, 1]} : vector<8x128xf32> to vector<8x32xf32>
    %133 = vector.extract_strided_slice %130 {offsets = [0, 32], sizes = [8, 32], strides = [1, 1]} : vector<8x128xf32> to vector<8x32xf32>
    %134 = vector.extract_strided_slice %131 {offsets = [0, 64], sizes = [8, 32], strides = [1, 1]} : vector<8x128xf32> to vector<8x32xf32>
    %135 = vector.extract_strided_slice %130 {offsets = [0, 96], sizes = [8, 32], strides = [1, 1]} : vector<8x128xf32> to vector<8x32xf32>
    %136 = arith.mulf %133, %119 : vector<8x32xf32>
    %137 = arith.mulf %132, %134 : vector<8x32xf32>
    %138 = arith.addf %136, %137 : vector<8x32xf32>
    %139 = math.tanh %138 : vector<8x32xf32>
    %140 = arith.mulf %135, %139 : vector<8x32xf32>
    %141 = vector.extract_strided_slice %5 {offsets = [56, 0], sizes = [8, 128], strides = [1, 1]} : vector<64x128xf32> to vector<8x128xf32>
    %c0_37 = arith.constant 0 : index
    %c0_38 = arith.constant 0 : index
    %142 = vector.load %arg4[%c0_37, %c0_38] : memref<32x128xf32, #tpu.memory_space<vmem>>, vector<32x128xf32>
    %cst_39 = arith.constant dense<0.000000e+00> : vector<8x128xf32>
    %143 = tpu.matmul %140, %142, %cst_39 {dimension_numbers = #tpu.dot_dimension_numbers<[1], [0], [0], [1], [0, 0, 1, 1], [], []>} : vector<8x32xf32>, vector<32x128xf32>, vector<8x128xf32> -> vector<8x128xf32>
    %144 = arith.addf %141, %143 : vector<8x128xf32>
    %145 = arith.negf %144 : vector<8x128xf32>
    %146 = math.exp %145 : vector<8x128xf32>
    %cst_40 = arith.constant 1.000000e+00 : f32
    %147 = vector.broadcast %cst_40 : f32 to vector<8x128xf32>
    %148 = arith.addf %147, %146 : vector<8x128xf32>
    %149 = arith.divf %147, %148 : vector<8x128xf32>
    %150 = math.tanh %144 : vector<8x128xf32>
    %151 = vector.extract_strided_slice %149 {offsets = [0, 0], sizes = [8, 32], strides = [1, 1]} : vector<8x128xf32> to vector<8x32xf32>
    %152 = vector.extract_strided_slice %149 {offsets = [0, 32], sizes = [8, 32], strides = [1, 1]} : vector<8x128xf32> to vector<8x32xf32>
    %153 = vector.extract_strided_slice %150 {offsets = [0, 64], sizes = [8, 32], strides = [1, 1]} : vector<8x128xf32> to vector<8x32xf32>
    %154 = vector.extract_strided_slice %149 {offsets = [0, 96], sizes = [8, 32], strides = [1, 1]} : vector<8x128xf32> to vector<8x32xf32>
    %155 = arith.mulf %152, %138 : vector<8x32xf32>
    %156 = arith.mulf %151, %153 : vector<8x32xf32>
    %157 = arith.addf %155, %156 : vector<8x32xf32>
    %158 = math.tanh %157 : vector<8x32xf32>
    %159 = arith.mulf %154, %158 : vector<8x32xf32>
    %c0_41 = arith.constant 0 : index
    %c0_42 = arith.constant 0 : index
    %160 = vector.load %arg11[%c0_41, %c0_42] : memref<8x32xf32, #tpu.memory_space<vmem>>, vector<8x32xf32>
    tpu.vector_store %arg11[%c0_41, %c0_42], %159 {strides = array<i32>} : memref<8x32xf32, #tpu.memory_space<vmem>>, vector<8x32xf32>,
    %c0_43 = arith.constant 0 : index
    %c0_44 = arith.constant 0 : index
    %161 = vector.load %arg12[%c0_43, %c0_44] : memref<8x32xf32, #tpu.memory_space<vmem>>, vector<8x32xf32>
    tpu.vector_store %arg12[%c0_43, %c0_44], %157 {strides = array<i32>} : memref<8x32xf32, #tpu.memory_space<vmem>>, vector<8x32xf32>,
    %162 = tpu.concatenate %26, %45, %64, %83, %102, %121, %140, %159 in 0 : vector<8x32xf32>, vector<8x32xf32>, vector<8x32xf32>, vector<8x32xf32>, vector<8x32xf32>, vector<8x32xf32>, vector<8x32xf32>, vector<8x32xf32> -> vector<64x32xf32>
    %c0_45 = arith.constant 0 : index
    %c0_46 = arith.constant 0 : index
    %163 = vector.load %arg6[%c0_45, %c0_46] : memref<64x1xf32, #tpu.memory_space<vmem>>, vector<64x1xf32>
    %c0_47 = arith.constant 0 : index
    %c0_48 = arith.constant 0 : index
    %164 = vector.load %arg7[%c0_47, %c0_48] : memref<32x5xf32, #tpu.memory_space<vmem>>, vector<32x5xf32>
    %cst_49 = arith.constant dense<0.000000e+00> : vector<64x5xf32>
    %165 = tpu.matmul %162, %164, %cst_49 {dimension_numbers = #tpu.dot_dimension_numbers<[1], [0], [0], [1], [0, 0, 1, 1], [], []>} : vector<64x32xf32>, vector<32x5xf32>, vector<64x5xf32> -> vector<64x5xf32>
    %c0_50 = arith.constant 0 : index
    %c0_51 = arith.constant 0 : index
    %166 = vector.load %arg8[%c0_50, %c0_51] : memref<1x5xf32, #tpu.memory_space<vmem>>, vector<1x5xf32>
    %167 = vector.broadcast %163 : vector<64x1xf32> to vector<64x5xf32>
    %168 = vector.broadcast %166 : vector<1x5xf32> to vector<64x5xf32>
    %169 = arith.mulf %167, %168 : vector<64x5xf32>
    %170 = arith.addf %165, %169 : vector<64x5xf32>
    %c0_52 = arith.constant 0 : index
    %c0_53 = arith.constant 0 : index
    %171 = vector.load %arg9[%c0_52, %c0_53] : memref<1x5xf32, #tpu.memory_space<vmem>>, vector<1x5xf32>
    %172 = vector.broadcast %171 : vector<1x5xf32> to vector<64x5xf32>
    %173 = arith.addf %170, %172 : vector<64x5xf32>
    %174 = vector.extract_strided_slice %173 {offsets = [0, 0], sizes = [64, 4], strides = [1, 1]} : vector<64x5xf32> to vector<64x4xf32>
    %175 = vector.extract_strided_slice %173 {offsets = [0, 4], sizes = [64, 1], strides = [1, 1]} : vector<64x5xf32> to vector<64x1xf32>
    %176 = vector.broadcast %175 : vector<64x1xf32> to vector<64x4xf32>
    %177 = arith.addf %176, %174 : vector<64x4xf32>
    %cst_54 = arith.constant dense<0.000000e+00> : vector<64xf32>
    %178 = vector.multi_reduction <add>, %174, %cst_54 [1] : vector<64x4xf32> to vector<64xf32>
    %179 = vector.shape_cast %178 : vector<64xf32> to vector<64x1xf32>
    %cst_55 = arith.constant 4.000000e+00 : f32
    %180 = vector.broadcast %cst_55 : f32 to vector<64x1xf32>
    %181 = arith.divf %179, %180 : vector<64x1xf32>
    %182 = vector.broadcast %181 : vector<64x1xf32> to vector<64x4xf32>
    %183 = arith.subf %177, %182 : vector<64x4xf32>
    %c0_56 = arith.constant 0 : index
    %c0_57 = arith.constant 0 : index
    %184 = vector.load %arg10[%c0_56, %c0_57] : memref<64x4xf32, #tpu.memory_space<vmem>>, vector<64x4xf32>
    tpu.vector_store %arg10[%c0_56, %c0_57], %183 {strides = array<i32>} : memref<64x4xf32, #tpu.memory_space<vmem>>, vector<64x4xf32>,
    return
  }
}

</mosaic_0001>

<llo_original>
// kernel: tpu_custom_call.1
$region0: #{tpu_custom_call.1}
  #allocation0 [shape = 'u32[]', space=smem, size = 0x4, offset = 0x4, fixed_abs, tag = 'smem constant byte address 0x4 - core index']
  #allocation1 [shape = 'u32[72,128]{1,0:T(1,128)}', space=vmem, size = 0x9000, scoped, tag = 'internal scratch']
  %s0 = inlined_call_operand.vmem [shape: f32[64,4], index: 0, kind: input, shape index: {}]
  %s1 = inlined_call_operand.vmem [shape: f32[8,32], index: 1, kind: input, shape index: {}, may-alias: {1,11}]
  %s2 = inlined_call_operand.vmem [shape: f32[8,32], index: 2, kind: input, shape index: {}, may-alias: {2,12}]
  %s3 = inlined_call_operand.vmem [shape: f32[4,128], index: 3, kind: input, shape index: {}]
  %s4 = inlined_call_operand.vmem [shape: f32[32,128], index: 4, kind: input, shape index: {}]
  %s5 = inlined_call_operand.vmem [shape: f32[1,128], index: 5, kind: input, shape index: {}]
  %s6 = inlined_call_operand.vmem [shape: f32[64,1], index: 6, kind: input, shape index: {}]
  %s7 = inlined_call_operand.vmem [shape: f32[32,5], index: 7, kind: input, shape index: {}]
  %s8 = inlined_call_operand.vmem [shape: f32[1,5], index: 8, kind: input, shape index: {}]
  %s9 = inlined_call_operand.vmem [shape: f32[1,5], index: 9, kind: input, shape index: {}]
  %s10 = inlined_call_operand.vmem [shape: f32[64,4], index: 10, kind: output, shape index: {0}]
  %s11 = inlined_call_operand.vmem [shape: f32[8,32], index: 11, kind: output, shape index: {1}, may-alias: {1,11}]
  %s12 = inlined_call_operand.vmem [shape: f32[8,32], index: 12, kind: output, shape index: {2}, may-alias: {2,12}]
  %13 = xla_tuple %s10, %s11, %s12
  %s14 = sld [smem:[#allocation0]]
  $region66: #{tpu_custom_call.1} parent=0
    _
  %s16 = ssub.s32 1, %s14
  %s17 = scalar_select 0, %s16, %s14
  // Predicated region
  $region2: #{tpu_custom_call.1} parent=0 // pred_check
    _
  $region3: #{tpu_custom_call.1} parent=0 // pred_check_branch
    %19 = sbr.rel (0) target = $region5
  $region4: #{tpu_custom_call.1} parent=0 // pred_region
    _
  $region5: #{tpu_custom_call.1} parent=0 // pred_fallthru
    _
  // Predicated region
  $region6: #{tpu_custom_call.1} parent=0 // pred_check
    _
  $region7: #{tpu_custom_call.1} parent=0 // pred_check_branch
    %21 = sbr.rel (0) target = $region9
  $region8: #{tpu_custom_call.1} parent=0 // pred_region
    _
  $region9: #{tpu_custom_call.1} parent=0 // pred_fallthru
    _
  // Predicated region
  $region10: #{tpu_custom_call.1} parent=0 // pred_check
    _
  $region11: #{tpu_custom_call.1} parent=0 // pred_check_branch
    %23 = sbr.rel (0) target = $region13
  $region12: #{tpu_custom_call.1} parent=0 // pred_region
    _
  $region13: #{tpu_custom_call.1} parent=0 // pred_fallthru
    _
  // Predicated region
  $region14: #{tpu_custom_call.1} parent=0 // pred_check
    _
  $region15: #{tpu_custom_call.1} parent=0 // pred_check_branch
    %25 = sbr.rel (0) target = $region17
  $region16: #{tpu_custom_call.1} parent=0 // pred_region
    _
  $region17: #{tpu_custom_call.1} parent=0 // pred_fallthru
    _
  // Predicated region
  $region18: #{tpu_custom_call.1} parent=0 // pred_check
    _
  $region19: #{tpu_custom_call.1} parent=0 // pred_check_branch
    %27 = sbr.rel (0) target = $region21
  $region20: #{tpu_custom_call.1} parent=0 // pred_region
    _
  $region21: #{tpu_custom_call.1} parent=0 // pred_fallthru
    _
  // Predicated region
  $region22: #{tpu_custom_call.1} parent=0 // pred_check
    _
  $region23: #{tpu_custom_call.1} parent=0 // pred_check_branch
    %29 = sbr.rel (0) target = $region25
  $region24: #{tpu_custom_call.1} parent=0 // pred_region
    _
  $region25: #{tpu_custom_call.1} parent=0 // pred_fallthru
    _
  // Predicated region
  $region26: #{tpu_custom_call.1} parent=0 // pred_check
    _
  $region27: #{tpu_custom_call.1} parent=0 // pred_check_branch
    %31 = sbr.rel (0) target = $region29
  $region28: #{tpu_custom_call.1} parent=0 // pred_region
    _
  $region29: #{tpu_custom_call.1} parent=0 // pred_fallthru
    _
  // Predicated region
  $region30: #{tpu_custom_call.1} parent=0 // pred_check
    _
  $region31: #{tpu_custom_call.1} parent=0 // pred_check_branch
    %33 = sbr.rel (0) target = $region33
  $region32: #{tpu_custom_call.1} parent=0 // pred_region
    _
  $region33: #{tpu_custom_call.1} parent=0 // pred_fallthru
    _
  // Predicated region
  $region34: #{tpu_custom_call.1} parent=0 // pred_check
    _
  $region35: #{tpu_custom_call.1} parent=0 // pred_check_branch
    %35 = sbr.rel (0) target = $region37
  $region36: #{tpu_custom_call.1} parent=0 // pred_region
    _
  $region37: #{tpu_custom_call.1} parent=0 // pred_fallthru
    _
  // Predicated region
  $region38: #{tpu_custom_call.1} parent=0 // pred_check
    _
  $region39: #{tpu_custom_call.1} parent=0 // pred_check_branch
    %37 = sbr.rel (0) target = $region41
  $region40: #{tpu_custom_call.1} parent=0 // pred_region
    _
  $region41: #{tpu_custom_call.1} parent=0 // pred_fallthru
    _
  %v38 = vld [vmem:[%s0] sm:$0xff]
  %v39 = vld [vmem:[%s0 + $0x8] sm:$0xff]
  %v40 = vld [vmem:[%s0 + $0x10] sm:$0xff]
  %v41 = vld [vmem:[%s0 + $0x18] sm:$0xff]
  %v42 = vld [vmem:[%s0 + $0x20] sm:$0xff]
  %v43 = vld [vmem:[%s0 + $0x28] sm:$0xff]
  %v44 = vld [vmem:[%s0 + $0x30] sm:$0xff]
  %v45 = vld [vmem:[%s0 + $0x38] sm:$0xff]
  %v46 = vld [vmem:[%s3] sm:$0xf]
  %v47 = vld [vmem:[%s5] sm:$0x1]
  %v49 = vperm.slane %v47, 0
  %vm51 = vcmask 31744
  %v53 = vsel %vm51, %v38, 0
  %v56 = vsel %vm51, %v39, 0
  %v59 = vsel %vm51, %v40, 0
  %v62 = vsel %vm51, %v41, 0
  %v65 = vsel %vm51, %v42, 0
  %v68 = vsel %vm51, %v43, 0
  %v71 = vsel %vm51, %v44, 0
  %v74 = vsel %vm51, %v45, 0
  %vm76 = vcmask 1043456
  %v78 = vsel %vm76, %v46, 0
  %80 = vmatpush.msra.mxu0 0.0
  %81 = vmatpush.msra.mxu0 0.0
  %82 = vmatpush.msra.mxu0 0.0
  %83 = vmatpush.msra.mxu0 0.0
  %84 = vmatpush.msra.mxu0 0.0
  %85 = vmatpush.msra.mxu0 0.0
  %86 = vmatpush.msra.mxu0 0.0
  %87 = vmatpush.msra.mxu0 0.0
  %88 = vmatpush.msra.mxu0 0.0
  %89 = vmatpush.msra.mxu0 0.0
  %90 = vmatpush.msra.mxu0 0.0
  %91 = vmatpush.msra.mxu0 0.0
  %92 = vmatpush.msra.mxu0 0.0
  %93 = vmatpush.msra.mxu0 0.0
  %94 = vmatpush.msra.mxu0 0.0
  %95 = vmatpush.msra.mxu0 %v78
  %96 = vmatmul.f32.gmra.mxu0 %v53
  %v97 = vpop.f32.mrf.mxu0
  %v98 = vadd.f32 %v49, %v97
  %99 = vmatmul.f32.gmra.mxu0 %v56
  %v100 = vpop.f32.mrf.mxu0
  %v101 = vadd.f32 %v49, %v100
  %102 = vmatmul.f32.gmra.mxu0 %v59
  %v103 = vpop.f32.mrf.mxu0
  %v104 = vadd.f32 %v49, %v103
  %105 = vmatmul.f32.gmra.mxu0 %v62
  %v106 = vpop.f32.mrf.mxu0
  %v107 = vadd.f32 %v49, %v106
  %108 = vmatmul.f32.gmra.mxu0 %v65
  %v109 = vpop.f32.mrf.mxu0
  %v110 = vadd.f32 %v49, %v109
  %111 = vmatmul.f32.gmra.mxu0 %v68
  %v112 = vpop.f32.mrf.mxu0
  %v113 = vadd.f32 %v49, %v112
  %114 = vmatmul.f32.gmra.mxu0 %v71
  %v115 = vpop.f32.mrf.mxu0
  %v116 = vadd.f32 %v49, %v115
  %117 = vmatmul.f32.gmra.mxu0 %v74
  %v118 = vpop.f32.mrf.mxu0
  %v119 = vadd.f32 %v49, %v118
  %120 = vdwg.mxu0
  %v121 = vld [vmem:[%s1] sm:$0xff]
  %v122 = vld [vmem:[%s2] sm:$0xff]
  %v123 = vld [vmem:[%s4] sm:$0xff]
  %v124 = vld [vmem:[%s4 + $0x8] sm:$0xff]
  %v125 = vld [vmem:[%s4 + $0x10] sm:$0xff]
  %v126 = vld [vmem:[%s4 + $0x18] sm:$0xff]
  %vm127 = vcmask 261120
  %v129 = vsel %vm127, %v121, 0
  %131 = vmatpush.msra.mxu0 0.0
  %132 = vmatpush.msra.mxu0 0.0
  %133 = vmatpush.msra.mxu0 0.0
  %134 = vmatpush.msra.mxu0 0.0
  %135 = vmatpush.msra.mxu0 0.0
  %136 = vmatpush.msra.mxu0 0.0
  %137 = vmatpush.msra.mxu0 0.0
  %138 = vmatpush.msra.mxu0 0.0
  %139 = vmatpush.msra.mxu0 0.0
  %140 = vmatpush.msra.mxu0 0.0
  %141 = vmatpush.msra.mxu0 0.0
  %142 = vmatpush.msra.mxu0 0.0
  %143 = vmatpush.msra.mxu0 %v126
  %144 = vmatpush.msra.mxu0 %v125
  %145 = vmatpush.msra.mxu0 %v124
  %146 = vmatpush.msra.mxu0 %v123
  %147 = vmatmul.f32.gmra.mxu0 %v129
  %v148 = vpop.f32.mrf.mxu0
  %v149 = vadd.f32 0.0, %v148
  %150 = vdwg.mxu0
  %v151 = vadd.f32 %v98, %v149
  %v152 = vxor.u32 %v151, 2147483648
  %v153 = vmul.f32 %v152, 1.442695
  %v154 = vpow.pop %v153
  %v155 = vadd.f32 %v154, 1.0
  %v156 = vrcp.pop %v155
  %v157 = vmul.f32 %v155, %v156
  %v158 = vsub.f32 1.0, %v157
  %v159 = vmul.f32 %v156, %v158
  %v160 = vadd.f32 %v156, %v159
  %vm161 = vweird.f32 %v155
  %vm162 = vweird.f32 %v156
  %vm163 = vmor %vm161, %vm162
  %v164 = vsel %vm163, %v156, %v160
  %v165 = vand.u32 2147483647, %v155
  %vm166 = vcmp.eq.f32.partialorder %v165, 8.507059e+37
  %v167 = vand.u32 %v155, 2147483648
  %v168 = vor.u32 1.1754944e-38, %v167
  %v169 = vsel %vm166, %v168, %v164
  %v170 = vmul.f32 1.0, %v169
  %v171 = vtanh.pop %v151
  %173 = vrot.lane.b32.xlu0 %v122, 32
  %v174 = vpop.permute.xlu0 %173
  %v176 = vmul.f32 %v170, %v174
  %178 = vrot.lane.b32.xlu0 %v171, 64
  %v179 = vpop.permute.xlu0 %178
  %v181 = vmul.f32 %v170, %v179
  %183 = vrot.lane.b32.xlu0 %v181, 32
  %v184 = vpop.permute.xlu0 %183
  %v186 = vadd.f32 %v176, %v184
  %v187 = vtanh.pop %v186
  %189 = vrot.lane.b32.xlu0 %v187, 64
  %v190 = vpop.permute.xlu0 %189
  %v192 = vmul.f32 %v170, %v190
  %194 = vrot.lane.b32.xlu0 %v192, 32
  %v195 = vpop.permute.xlu0 %194
  %v196 = vsel %vm127, %v195, 0
  %198 = vmatpush.msra.mxu0 0.0
  %199 = vmatpush.msra.mxu0 0.0
  %200 = vmatpush.msra.mxu0 0.0
  %201 = vmatpush.msra.mxu0 0.0
  %202 = vmatpush.msra.mxu0 0.0
  %203 = vmatpush.msra.mxu0 0.0
  %204 = vmatpush.msra.mxu0 0.0
  %205 = vmatpush.msra.mxu0 0.0
  %206 = vmatpush.msra.mxu0 0.0
  %207 = vmatpush.msra.mxu0 0.0
  %208 = vmatpush.msra.mxu0 0.0
  %209 = vmatpush.msra.mxu0 0.0
  %210 = vmatpush.msra.mxu0 %v126
  %211 = vmatpush.msra.mxu0 %v125
  %212 = vmatpush.msra.mxu0 %v124
  %213 = vmatpush.msra.mxu0 %v123
  %214 = vmatmul.f32.gmra.mxu0 %v196
  %v215 = vpop.f32.mrf.mxu0
  %v216 = vadd.f32 0.0, %v215
  %217 = vdwg.mxu0
  %v218 = vadd.f32 %v101, %v216
  %v219 = vxor.u32 %v218, 2147483648
  %v220 = vmul.f32 %v219, 1.442695
  %v221 = vpow.pop %v220
  %v222 = vadd.f32 %v221, 1.0
  %v223 = vrcp.pop %v222
  %v224 = vmul.f32 %v222, %v223
  %v225 = vsub.f32 1.0, %v224
  %v226 = vmul.f32 %v223, %v225
  %v227 = vadd.f32 %v223, %v226
  %vm228 = vweird.f32 %v222
  %vm229 = vweird.f32 %v223
  %vm230 = vmor %vm228, %vm229
  %v231 = vsel %vm230, %v223, %v227
  %v232 = vand.u32 2147483647, %v222
  %vm233 = vcmp.eq.f32.partialorder %v232, 8.507059e+37
  %v234 = vand.u32 %v222, 2147483648
  %v235 = vor.u32 1.1754944e-38, %v234
  %v236 = vsel %vm233, %v235, %v231
  %v237 = vmul.f32 1.0, %v236
  %v238 = vtanh.pop %v218
  %v239 = vmul.f32 %v237, %v186
  %241 = vrot.lane.b32.xlu0 %v238, 64
  %v242 = vpop.permute.xlu0 %241
  %v244 = vmul.f32 %v237, %v242
  %246 = vrot.lane.b32.xlu0 %v244, 32
  %v247 = vpop.permute.xlu0 %246
  %v249 = vadd.f32 %v239, %v247
  %v250 = vtanh.pop %v249
  %252 = vrot.lane.b32.xlu0 %v250, 64
  %v253 = vpop.permute.xlu0 %252
  %v255 = vmul.f32 %v237, %v253
  %257 = vrot.lane.b32.xlu0 %v255, 32
  %v258 = vpop.permute.xlu0 %257
  %v259 = vsel %vm127, %v258, 0
  %261 = vmatpush.msra.mxu0 0.0
  %262 = vmatpush.msra.mxu0 0.0
  %263 = vmatpush.msra.mxu0 0.0
  %264 = vmatpush.msra.mxu0 0.0
  %265 = vmatpush.msra.mxu0 0.0
  %266 = vmatpush.msra.mxu0 0.0
  %267 = vmatpush.msra.mxu0 0.0
  %268 = vmatpush.msra.mxu0 0.0
  %269 = vmatpush.msra.mxu0 0.0
  %270 = vmatpush.msra.mxu0 0.0
  %271 = vmatpush.msra.mxu0 0.0
  %272 = vmatpush.msra.mxu0 0.0
  %273 = vmatpush.msra.mxu0 %v126
  %274 = vmatpush.msra.mxu0 %v125
  %275 = vmatpush.msra.mxu0 %v124
  %276 = vmatpush.msra.mxu0 %v123
  %277 = vmatmul.f32.gmra.mxu0 %v259
  %v278 = vpop.f32.mrf.mxu0
  %v279 = vadd.f32 0.0, %v278
  %280 = vdwg.mxu0
  %v281 = vadd.f32 %v104, %v279
  %v282 = vxor.u32 %v281, 2147483648
  %v283 = vmul.f32 %v282, 1.442695
  %v284 = vpow.pop %v283
  %v285 = vadd.f32 %v284, 1.0
  %v286 = vrcp.pop %v285
  %v287 = vmul.f32 %v285, %v286
  %v288 = vsub.f32 1.0, %v287
  %v289 = vmul.f32 %v286, %v288
  %v290 = vadd.f32 %v286, %v289
  %vm291 = vweird.f32 %v285
  %vm292 = vweird.f32 %v286
  %vm293 = vmor %vm291, %vm292
  %v294 = vsel %vm293, %v286, %v290
  %v295 = vand.u32 2147483647, %v285
  %vm296 = vcmp.eq.f32.partialorder %v295, 8.507059e+37
  %v297 = vand.u32 %v285, 2147483648
  %v298 = vor.u32 1.1754944e-38, %v297
  %v299 = vsel %vm296, %v298, %v294
  %v300 = vmul.f32 1.0, %v299
  %v301 = vtanh.pop %v281
  %v302 = vmul.f32 %v300, %v249
  %304 = vrot.lane.b32.xlu0 %v301, 64
  %v305 = vpop.permute.xlu0 %304
  %v307 = vmul.f32 %v300, %v305
  %309 = vrot.lane.b32.xlu0 %v307, 32
  %v310 = vpop.permute.xlu0 %309
  %v312 = vadd.f32 %v302, %v310
  %v313 = vtanh.pop %v312
  %315 = vrot.lane.b32.xlu0 %v313, 64
  %v316 = vpop.permute.xlu0 %315
  %v318 = vmul.f32 %v300, %v316
  %320 = vrot.lane.b32.xlu0 %v318, 32
  %v321 = vpop.permute.xlu0 %320
  %v322 = vsel %vm127, %v321, 0
  %324 = vmatpush.msra.mxu0 0.0
  %325 = vmatpush.msra.mxu0 0.0
  %326 = vmatpush.msra.mxu0 0.0
  %327 = vmatpush.msra.mxu0 0.0
  %328 = vmatpush.msra.mxu0 0.0
  %329 = vmatpush.msra.mxu0 0.0
  %330 = vmatpush.msra.mxu0 0.0
  %331 = vmatpush.msra.mxu0 0.0
  %332 = vmatpush.msra.mxu0 0.0
  %333 = vmatpush.msra.mxu0 0.0
  %334 = vmatpush.msra.mxu0 0.0
  %335 = vmatpush.msra.mxu0 0.0
  %336 = vmatpush.msra.mxu0 %v126
  %337 = vmatpush.msra.mxu0 %v125
  %338 = vmatpush.msra.mxu0 %v124
  %339 = vmatpush.msra.mxu0 %v123
  %340 = vmatmul.f32.gmra.mxu0 %v322
  %v341 = vpop.f32.mrf.mxu0
  %v342 = vadd.f32 0.0, %v341
  %343 = vdwg.mxu0
  %v344 = vadd.f32 %v107, %v342
  %v345 = vxor.u32 %v344, 2147483648
  %v346 = vmul.f32 %v345, 1.442695
  %v347 = vpow.pop %v346
  %v348 = vadd.f32 %v347, 1.0
  %v349 = vrcp.pop %v348
  %v350 = vmul.f32 %v348, %v349
  %v351 = vsub.f32 1.0, %v350
  %v352 = vmul.f32 %v349, %v351
  %v353 = vadd.f32 %v349, %v352
  %vm354 = vweird.f32 %v348
  %vm355 = vweird.f32 %v349
  %vm356 = vmor %vm354, %vm355
  %v357 = vsel %vm356, %v349, %v353
  %v358 = vand.u32 2147483647, %v348
  %vm359 = vcmp.eq.f32.partialorder %v358, 8.507059e+37
  %v360 = vand.u32 %v348, 2147483648
  %v361 = vor.u32 1.1754944e-38, %v360
  %v362 = vsel %vm359, %v361, %v357
  %v363 = vmul.f32 1.0, %v362
  %v364 = vtanh.pop %v344
  %v365 = vmul.f32 %v363, %v312
  %367 = vrot.lane.b32.xlu0 %v364, 64
  %v368 = vpop.permute.xlu0 %367
  %v370 = vmul.f32 %v363, %v368
  %372 = vrot.lane.b32.xlu0 %v370, 32
  %v373 = vpop.permute.xlu0 %372
  %v375 = vadd.f32 %v365, %v373
  %v376 = vtanh.pop %v375
  %378 = vrot.lane.b32.xlu0 %v376, 64
  %v379 = vpop.permute.xlu0 %378
  %v381 = vmul.f32 %v363, %v379
  %383 = vrot.lane.b32.xlu0 %v381, 32
  %v384 = vpop.permute.xlu0 %383
  %v385 = vsel %vm127, %v384, 0
  %387 = vmatpush.msra.mxu0 0.0
  %388 = vmatpush.msra.mxu0 0.0
  %389 = vmatpush.msra.mxu0 0.0
  %390 = vmatpush.msra.mxu0 0.0
  %391 = vmatpush.msra.mxu0 0.0
  %392 = vmatpush.msra.mxu0 0.0
  %393 = vmatpush.msra.mxu0 0.0
  %394 = vmatpush.msra.mxu0 0.0
  %395 = vmatpush.msra.mxu0 0.0
  %396 = vmatpush.msra.mxu0 0.0
  %397 = vmatpush.msra.mxu0 0.0
  %398 = vmatpush.msra.mxu0 0.0
  %399 = vmatpush.msra.mxu0 %v126
  %400 = vmatpush.msra.mxu0 %v125
  %401 = vmatpush.msra.mxu0 %v124
  %402 = vmatpush.msra.mxu0 %v123
  %403 = vmatmul.f32.gmra.mxu0 %v385
  %v404 = vpop.f32.mrf.mxu0
  %v405 = vadd.f32 0.0, %v404
  %406 = vdwg.mxu0
  %v407 = vadd.f32 %v110, %v405
  %v408 = vxor.u32 %v407, 2147483648
  %v409 = vmul.f32 %v408, 1.442695
  %v410 = vpow.pop %v409
  %v411 = vadd.f32 %v410, 1.0
  %v412 = vrcp.pop %v411
  %v413 = vmul.f32 %v411, %v412
  %v414 = vsub.f32 1.0, %v413
  %v415 = vmul.f32 %v412, %v414
  %v416 = vadd.f32 %v412, %v415
  %vm417 = vweird.f32 %v411
  %vm418 = vweird.f32 %v412
  %vm419 = vmor %vm417, %vm418
  %v420 = vsel %vm419, %v412, %v416
  %v421 = vand.u32 2147483647, %v411
  %vm422 = vcmp.eq.f32.partialorder %v421, 8.507059e+37
  %v423 = vand.u32 %v411, 2147483648
  %v424 = vor.u32 1.1754944e-38, %v423
  %v425 = vsel %vm422, %v424, %v420
  %v426 = vmul.f32 1.0, %v425
  %v427 = vtanh.pop %v407
  %v428 = vmul.f32 %v426, %v375
  %430 = vrot.lane.b32.xlu0 %v427, 64
  %v431 = vpop.permute.xlu0 %430
  %v433 = vmul.f32 %v426, %v431
  %435 = vrot.lane.b32.xlu0 %v433, 32
  %v436 = vpop.permute.xlu0 %435
  %v438 = vadd.f32 %v428, %v436
  %v439 = vtanh.pop %v438
  %441 = vrot.lane.b32.xlu0 %v439, 64
  %v442 = vpop.permute.xlu0 %441
  %v444 = vmul.f32 %v426, %v442
  %446 = vrot.lane.b32.xlu0 %v444, 32
  %v447 = vpop.permute.xlu0 %446
  %v448 = vsel %vm127, %v447, 0
  %450 = vmatpush.msra.mxu0 0.0
  %451 = vmatpush.msra.mxu0 0.0
  %452 = vmatpush.msra.mxu0 0.0
  %453 = vmatpush.msra.mxu0 0.0
  %454 = vmatpush.msra.mxu0 0.0
  %455 = vmatpush.msra.mxu0 0.0
  %456 = vmatpush.msra.mxu0 0.0
  %457 = vmatpush.msra.mxu0 0.0
  %458 = vmatpush.msra.mxu0 0.0
  %459 = vmatpush.msra.mxu0 0.0
  %460 = vmatpush.msra.mxu0 0.0
  %461 = vmatpush.msra.mxu0 0.0
  %462 = vmatpush.msra.mxu0 %v126
  %463 = vmatpush.msra.mxu0 %v125
  %464 = vmatpush.msra.mxu0 %v124
  %465 = vmatpush.msra.mxu0 %v123
  %466 = vmatmul.f32.gmra.mxu0 %v448
  %v467 = vpop.f32.mrf.mxu0
  %v468 = vadd.f32 0.0, %v467
  %469 = vdwg.mxu0
  %v470 = vadd.f32 %v113, %v468
  %v471 = vxor.u32 %v470, 2147483648
  %v472 = vmul.f32 %v471, 1.442695
  %v473 = vpow.pop %v472
  %v474 = vadd.f32 %v473, 1.0
  %v475 = vrcp.pop %v474
  %v476 = vmul.f32 %v474, %v475
  %v477 = vsub.f32 1.0, %v476
  %v478 = vmul.f32 %v475, %v477
  %v479 = vadd.f32 %v475, %v478
  %vm480 = vweird.f32 %v474
  %vm481 = vweird.f32 %v475
  %vm482 = vmor %vm480, %vm481
  %v483 = vsel %vm482, %v475, %v479
  %v484 = vand.u32 2147483647, %v474
  %vm485 = vcmp.eq.f32.partialorder %v484, 8.507059e+37
  %v486 = vand.u32 %v474, 2147483648
  %v487 = vor.u32 1.1754944e-38, %v486
  %v488 = vsel %vm485, %v487, %v483
  %v489 = vmul.f32 1.0, %v488
  %v490 = vtanh.pop %v470
  %v491 = vmul.f32 %v489, %v438
  %493 = vrot.lane.b32.xlu0 %v490, 64
  %v494 = vpop.permute.xlu0 %493
  %v496 = vmul.f32 %v489, %v494
  %498 = vrot.lane.b32.xlu0 %v496, 32
  %v499 = vpop.permute.xlu0 %498
  %v501 = vadd.f32 %v491, %v499
  %v502 = vtanh.pop %v501
  %504 = vrot.lane.b32.xlu0 %v502, 64
  %v505 = vpop.permute.xlu0 %504
  %v507 = vmul.f32 %v489, %v505
  %509 = vrot.lane.b32.xlu0 %v507, 32
  %v510 = vpop.permute.xlu0 %509
  %v511 = vsel %vm127, %v510, 0
  %513 = vmatpush.msra.mxu0 0.0
  %514 = vmatpush.msra.mxu0 0.0
  %515 = vmatpush.msra.mxu0 0.0
  %516 = vmatpush.msra.mxu0 0.0
  %517 = vmatpush.msra.mxu0 0.0
  %518 = vmatpush.msra.mxu0 0.0
  %519 = vmatpush.msra.mxu0 0.0
  %520 = vmatpush.msra.mxu0 0.0
  %521 = vmatpush.msra.mxu0 0.0
  %522 = vmatpush.msra.mxu0 0.0
  %523 = vmatpush.msra.mxu0 0.0
  %524 = vmatpush.msra.mxu0 0.0
  %525 = vmatpush.msra.mxu0 %v126
  %526 = vmatpush.msra.mxu0 %v125
  %527 = vmatpush.msra.mxu0 %v124
  %528 = vmatpush.msra.mxu0 %v123
  %529 = vmatmul.f32.gmra.mxu0 %v511
  %v530 = vpop.f32.mrf.mxu0
  %v531 = vadd.f32 0.0, %v530
  %532 = vdwg.mxu0
  %v533 = vadd.f32 %v116, %v531
  %v534 = vxor.u32 %v533, 2147483648
  %v535 = vmul.f32 %v534, 1.442695
  %v536 = vpow.pop %v535
  %v537 = vadd.f32 %v536, 1.0
  %v538 = vrcp.pop %v537
  %v539 = vmul.f32 %v537, %v538
  %v540 = vsub.f32 1.0, %v539
  %v541 = vmul.f32 %v538, %v540
  %v542 = vadd.f32 %v538, %v541
  %vm543 = vweird.f32 %v537
  %vm544 = vweird.f32 %v538
  %vm545 = vmor %vm543, %vm544
  %v546 = vsel %vm545, %v538, %v542
  %v547 = vand.u32 2147483647, %v537
  %vm548 = vcmp.eq.f32.partialorder %v547, 8.507059e+37
  %v549 = vand.u32 %v537, 2147483648
  %v550 = vor.u32 1.1754944e-38, %v549
  %v551 = vsel %vm548, %v550, %v546
  %v552 = vmul.f32 1.0, %v551
  %v553 = vtanh.pop %v533
  %v554 = vmul.f32 %v552, %v501
  %556 = vrot.lane.b32.xlu0 %v553, 64
  %v557 = vpop.permute.xlu0 %556
  %v559 = vmul.f32 %v552, %v557
  %561 = vrot.lane.b32.xlu0 %v559, 32
  %v562 = vpop.permute.xlu0 %561
  %v564 = vadd.f32 %v554, %v562
  %v565 = vtanh.pop %v564
  %567 = vrot.lane.b32.xlu0 %v565, 64
  %v568 = vpop.permute.xlu0 %567
  %v570 = vmul.f32 %v552, %v568
  %572 = vrot.lane.b32.xlu0 %v570, 32
  %v573 = vpop.permute.xlu0 %572
  %v574 = vsel %vm127, %v573, 0
  %576 = vmatpush.msra.mxu0 0.0
  %577 = vmatpush.msra.mxu0 0.0
  %578 = vmatpush.msra.mxu0 0.0
  %579 = vmatpush.msra.mxu0 0.0
  %580 = vmatpush.msra.mxu0 0.0
  %581 = vmatpush.msra.mxu0 0.0
  %582 = vmatpush.msra.mxu0 0.0
  %583 = vmatpush.msra.mxu0 0.0
  %584 = vmatpush.msra.mxu0 0.0
  %585 = vmatpush.msra.mxu0 0.0
  %586 = vmatpush.msra.mxu0 0.0
  %587 = vmatpush.msra.mxu0 0.0
  %588 = vmatpush.msra.mxu0 %v126
  %589 = vmatpush.msra.mxu0 %v125
  %590 = vmatpush.msra.mxu0 %v124
  %591 = vmatpush.msra.mxu0 %v123
  %592 = vmatmul.f32.gmra.mxu0 %v574
  %v593 = vpop.f32.mrf.mxu0
  %v594 = vadd.f32 0.0, %v593
  %595 = vdwg.mxu0
  %v596 = vadd.f32 %v119, %v594
  %v597 = vxor.u32 %v596, 2147483648
  %v598 = vmul.f32 %v597, 1.442695
  %v599 = vpow.pop %v598
  %v600 = vadd.f32 %v599, 1.0
  %v601 = vrcp.pop %v600
  %v602 = vmul.f32 %v600, %v601
  %v603 = vsub.f32 1.0, %v602
  %v604 = vmul.f32 %v601, %v603
  %v605 = vadd.f32 %v601, %v604
  %vm606 = vweird.f32 %v600
  %vm607 = vweird.f32 %v601
  %vm608 = vmor %vm606, %vm607
  %v609 = vsel %vm608, %v601, %v605
  %v610 = vand.u32 2147483647, %v600
  %vm611 = vcmp.eq.f32.partialorder %v610, 8.507059e+37
  %v612 = vand.u32 %v600, 2147483648
  %v613 = vor.u32 1.1754944e-38, %v612
  %v614 = vsel %vm611, %v613, %v609
  %v615 = vmul.f32 1.0, %v614
  %v616 = vtanh.pop %v596
  %v617 = vmul.f32 %v615, %v564
  %619 = vrot.lane.b32.xlu0 %v616, 64
  %v620 = vpop.permute.xlu0 %619
  %v622 = vmul.f32 %v615, %v620
  %624 = vrot.lane.b32.xlu0 %v622, 32
  %v625 = vpop.permute.xlu0 %624
  %v627 = vadd.f32 %v617, %v625
  %v628 = vtanh.pop %v627
  %630 = vrot.lane.b32.xlu0 %v628, 64
  %v631 = vpop.permute.xlu0 %630
  %v633 = vmul.f32 %v615, %v631
  %635 = vrot.lane.b32.xlu0 %v633, 32
  %v636 = vpop.permute.xlu0 %635
  %638 = vst.msk [vmem:[%s11] sm:$0xff] %vm127, %v636
  %640 = vrot.lane.b32.xlu0 %v627, 96
  %v641 = vpop.permute.xlu0 %640
  %643 = vst.msk [vmem:[%s12] sm:$0xff] %vm127, %v641
  %v644 = vld [vmem:[%s6] sm:$0xff]
  %v645 = vld [vmem:[%s6 + $0x8] sm:$0xff]
  %v646 = vld [vmem:[%s6 + $0x10] sm:$0xff]
  %v647 = vld [vmem:[%s6 + $0x18] sm:$0xff]
  %v648 = vld [vmem:[%s6 + $0x20] sm:$0xff]
  %v649 = vld [vmem:[%s6 + $0x28] sm:$0xff]
  %v650 = vld [vmem:[%s6 + $0x30] sm:$0xff]
  %v651 = vld [vmem:[%s6 + $0x38] sm:$0xff]
  %v652 = vld [vmem:[%s7] sm:$0xff]
  %v653 = vld [vmem:[%s7 + $0x8] sm:$0xff]
  %v654 = vld [vmem:[%s7 + $0x10] sm:$0xff]
  %v655 = vld [vmem:[%s7 + $0x18] sm:$0xff]
  %v656 = vld [vmem:[%s8] sm:$0x1]
  %658 = vset.pattern.permute.xlu0 0
  %659 = vperm.xlu0 %658, %v644
  %v660 = vpop.permute.xlu0 %659
  %663 = vset.pattern.permute.xlu0 0
  %664 = vperm.xlu0 %663, %v645
  %v665 = vpop.permute.xlu0 %664
  %668 = vset.pattern.permute.xlu0 0
  %669 = vperm.xlu0 %668, %v646
  %v670 = vpop.permute.xlu0 %669
  %673 = vset.pattern.permute.xlu0 0
  %674 = vperm.xlu0 %673, %v647
  %v675 = vpop.permute.xlu0 %674
  %678 = vset.pattern.permute.xlu0 0
  %679 = vperm.xlu0 %678, %v648
  %v680 = vpop.permute.xlu0 %679
  %683 = vset.pattern.permute.xlu0 0
  %684 = vperm.xlu0 %683, %v649
  %v685 = vpop.permute.xlu0 %684
  %688 = vset.pattern.permute.xlu0 0
  %689 = vperm.xlu0 %688, %v650
  %v690 = vpop.permute.xlu0 %689
  %693 = vset.pattern.permute.xlu0 0
  %694 = vperm.xlu0 %693, %v651
  %v695 = vpop.permute.xlu0 %694
  %v698 = vperm.slane %v656, 0
  %v700 = vmul.f32 %v660, %v698
  %v701 = vmul.f32 %v665, %v698
  %v702 = vmul.f32 %v670, %v698
  %v703 = vmul.f32 %v675, %v698
  %v704 = vmul.f32 %v680, %v698
  %v705 = vmul.f32 %v685, %v698
  %v706 = vmul.f32 %v690, %v698
  %v707 = vmul.f32 %v695, %v698
  %v708 = vsel %vm127, %v636, 0
  %710 = vmatpush.msra.mxu0 0.0
  %711 = vmatpush.msra.mxu0 0.0
  %712 = vmatpush.msra.mxu0 0.0
  %713 = vmatpush.msra.mxu0 0.0
  %714 = vmatpush.msra.mxu0 0.0
  %715 = vmatpush.msra.mxu0 0.0
  %716 = vmatpush.msra.mxu0 0.0
  %717 = vmatpush.msra.mxu0 0.0
  %718 = vmatpush.msra.mxu0 0.0
  %719 = vmatpush.msra.mxu0 0.0
  %720 = vmatpush.msra.mxu0 0.0
  %721 = vmatpush.msra.mxu0 0.0
  %722 = vmatpush.msra.mxu0 %v655
  %723 = vmatpush.msra.mxu0 %v654
  %724 = vmatpush.msra.mxu0 %v653
  %725 = vmatpush.msra.mxu0 %v652
  %726 = vmatmul.f32.gmra.mxu0 %v196
  %v727 = vpop.f32.mrf.mxu0
  %v728 = vadd.f32 %v700, %v727
  %729 = vmatmul.f32.gmra.mxu0 %v259
  %v730 = vpop.f32.mrf.mxu0
  %v731 = vadd.f32 %v701, %v730
  %732 = vmatmul.f32.gmra.mxu0 %v322
  %v733 = vpop.f32.mrf.mxu0
  %v734 = vadd.f32 %v702, %v733
  %735 = vmatmul.f32.gmra.mxu0 %v385
  %v736 = vpop.f32.mrf.mxu0
  %v737 = vadd.f32 %v703, %v736
  %738 = vmatmul.f32.gmra.mxu0 %v448
  %v739 = vpop.f32.mrf.mxu0
  %v740 = vadd.f32 %v704, %v739
  %741 = vmatmul.f32.gmra.mxu0 %v511
  %v742 = vpop.f32.mrf.mxu0
  %v743 = vadd.f32 %v705, %v742
  %744 = vmatmul.f32.gmra.mxu0 %v574
  %v745 = vpop.f32.mrf.mxu0
  %v746 = vadd.f32 %v706, %v745
  %747 = vmatmul.f32.gmra.mxu0 %v708
  %v748 = vpop.f32.mrf.mxu0
  %v749 = vadd.f32 %v707, %v748
  %750 = vdwg.mxu0
  %v751 = vld [vmem:[%s9] sm:$0x1]
  %v753 = vperm.slane %v751, 0
  %v755 = vadd.f32 %v728, %v753
  %v756 = vadd.f32 %v731, %v753
  %v757 = vadd.f32 %v734, %v753
  %v758 = vadd.f32 %v737, %v753
  %v759 = vadd.f32 %v740, %v753
  %v760 = vadd.f32 %v743, %v753
  %v761 = vadd.f32 %v746, %v753
  %v762 = vadd.f32 %v749, %v753
  %764 = vset.pattern.permute.xlu0 4
  %765 = vperm.xlu0 %764, %v755
  %v766 = vpop.permute.xlu0 %765
  %769 = vset.pattern.permute.xlu0 4
  %770 = vperm.xlu0 %769, %v756
  %v771 = vpop.permute.xlu0 %770
  %774 = vset.pattern.permute.xlu0 4
  %775 = vperm.xlu0 %774, %v757
  %v776 = vpop.permute.xlu0 %775
  %779 = vset.pattern.permute.xlu0 4
  %780 = vperm.xlu0 %779, %v758
  %v781 = vpop.permute.xlu0 %780
  %784 = vset.pattern.permute.xlu0 4
  %785 = vperm.xlu0 %784, %v759
  %v786 = vpop.permute.xlu0 %785
  %789 = vset.pattern.permute.xlu0 4
  %790 = vperm.xlu0 %789, %v760
  %v791 = vpop.permute.xlu0 %790
  %794 = vset.pattern.permute.xlu0 4
  %795 = vperm.xlu0 %794, %v761
  %v796 = vpop.permute.xlu0 %795
  %799 = vset.pattern.permute.xlu0 4
  %800 = vperm.xlu0 %799, %v762
  %v801 = vpop.permute.xlu0 %800
  %v803 = vadd.f32 %v766, %v755
  %v804 = vadd.f32 %v771, %v756
  %v805 = vadd.f32 %v776, %v757
  %v806 = vadd.f32 %v781, %v758
  %v807 = vadd.f32 %v786, %v759
  %v808 = vadd.f32 %v791, %v760
  %v809 = vadd.f32 %v796, %v761
  %v810 = vadd.f32 %v801, %v762
  %v811 = vsel %vm51, %v755, 0.0
  %812 = vadd.xlane.f32.xlu0 %v811
  %v813 = vpop.xlane.xlu0 %812
  %v814 = vsel %vm51, %v756, 0.0
  %815 = vadd.xlane.f32.xlu0 %v814
  %v816 = vpop.xlane.xlu0 %815
  %v817 = vsel %vm51, %v757, 0.0
  %818 = vadd.xlane.f32.xlu0 %v817
  %v819 = vpop.xlane.xlu0 %818
  %v820 = vsel %vm51, %v758, 0.0
  %821 = vadd.xlane.f32.xlu0 %v820
  %v822 = vpop.xlane.xlu0 %821
  %v823 = vsel %vm51, %v759, 0.0
  %824 = vadd.xlane.f32.xlu0 %v823
  %v825 = vpop.xlane.xlu0 %824
  %v826 = vsel %vm51, %v760, 0.0
  %827 = vadd.xlane.f32.xlu0 %v826
  %v828 = vpop.xlane.xlu0 %827
  %v829 = vsel %vm51, %v761, 0.0
  %830 = vadd.xlane.f32.xlu0 %v829
  %v831 = vpop.xlane.xlu0 %830
  %v832 = vsel %vm51, %v762, 0.0
  %833 = vadd.xlane.f32.xlu0 %v832
  %v834 = vpop.xlane.xlu0 %833
  %v835 = vrcp.pop 4.0
  %v836 = vmul.f32 4.0, %v835
  %v837 = vsub.f32 1.0, %v836
  %v838 = vmul.f32 %v835, %v837
  %v839 = vadd.f32 %v835, %v838
  %vm840 = vweird.f32 %v835
  %v841 = vsel %vm840, %v835, %v839
  %v842 = vmul.f32 %v813, %v841
  %v843 = vmul.f32 %v816, %v841
  %v844 = vmul.f32 %v819, %v841
  %v845 = vmul.f32 %v822, %v841
  %v846 = vmul.f32 %v825, %v841
  %v847 = vmul.f32 %v828, %v841
  %v848 = vmul.f32 %v831, %v841
  %v849 = vmul.f32 %v834, %v841
  %v850 = vsub.f32 %v803, %v842
  %v851 = vsub.f32 %v804, %v843
  %v852 = vsub.f32 %v805, %v844
  %v853 = vsub.f32 %v806, %v845
  %v854 = vsub.f32 %v807, %v846
  %v855 = vsub.f32 %v808, %v847
  %v856 = vsub.f32 %v809, %v848
  %v857 = vsub.f32 %v810, %v849
  %858 = vst.msk [vmem:[%s10] sm:$0xff] %vm51, %v850
  %859 = vst.msk [vmem:[%s10 + $0x8] sm:$0xff] %vm51, %v851
  %860 = vst.msk [vmem:[%s10 + $0x10] sm:$0xff] %vm51, %v852
  %861 = vst.msk [vmem:[%s10 + $0x18] sm:$0xff] %vm51, %v853
  %862 = vst.msk [vmem:[%s10 + $0x20] sm:$0xff] %vm51, %v854
  %863 = vst.msk [vmem:[%s10 + $0x28] sm:$0xff] %vm51, %v855
  %864 = vst.msk [vmem:[%s10 + $0x30] sm:$0xff] %vm51, %v856
  %865 = vst.msk [vmem:[%s10 + $0x38] sm:$0xff] %vm51, %v857
  // Predicated region
  $region42: #{tpu_custom_call.1} parent=0 // pred_check
    _
  $region43: #{tpu_custom_call.1} parent=0 // pred_check_branch
    %867 = sbr.rel (0) target = $region45
  $region44: #{tpu_custom_call.1} parent=0 // pred_region
    _
  $region45: #{tpu_custom_call.1} parent=0 // pred_fallthru
    _
  // Predicated region
  $region46: #{tpu_custom_call.1} parent=0 // pred_check
    _
  $region47: #{tpu_custom_call.1} parent=0 // pred_check_branch
    %869 = sbr.rel (0) target = $region49
  $region48: #{tpu_custom_call.1} parent=0 // pred_region
    _
  $region49: #{tpu_custom_call.1} parent=0 // pred_fallthru
    _
  // Predicated region
  $region50: #{tpu_custom_call.1} parent=0 // pred_check
    _
  $region51: #{tpu_custom_call.1} parent=0 // pred_check_branch
    %871 = sbr.rel (0) target = $region53
  $region52: #{tpu_custom_call.1} parent=0 // pred_region
    _
  $region53: #{tpu_custom_call.1} parent=0 // pred_fallthru
    _
  // Predicated region
  $region54: #{tpu_custom_call.1} parent=0 // pred_check
    _
  $region55: #{tpu_custom_call.1} parent=0 // pred_check_branch
    %873 = sbr.rel (0) target = $region57
  $region56: #{tpu_custom_call.1} parent=0 // pred_region
    _
  $region57: #{tpu_custom_call.1} parent=0 // pred_fallthru
    _
  // Predicated region
  $region58: #{tpu_custom_call.1} parent=0 // pred_check
    _
  $region59: #{tpu_custom_call.1} parent=0 // pred_check_branch
    %875 = sbr.rel (0) target = $region61
  $region60: #{tpu_custom_call.1} parent=0 // pred_region
    _
  $region61: #{tpu_custom_call.1} parent=0 // pred_fallthru
    _
  // Predicated region
  $region62: #{tpu_custom_call.1} parent=0 // pred_check
    _
  $region63: #{tpu_custom_call.1} parent=0 // pred_check_branch
    %877 = sbr.rel (0) target = $region65
  $region64: #{tpu_custom_call.1} parent=0 // pred_region
    _
  $region65: #{tpu_custom_call.1} parent=0 // pred_fallthru
    _

</llo_original>
